<compile_context>
chip_gen: v7x
topology: tpu7x:2x2x1
jax: 0.10.0
libtpu: 0.0.40
codegen_flags: <defaults>
</compile_context>

<pallas_src>
import functools

import jax
import jax.numpy as jnp
import numpy as np
from jax import lax
from jax.experimental import pallas as pl
from jax.experimental.pallas import tpu as pltpu

EPS = 1e-6


def _i32_const(v: int) -> int:
    """Reinterpret a uint32 literal as a (possibly negative) int32 literal."""
    v &= 0xFFFFFFFF
    return v - (1 << 32) if v >= (1 << 31) else v


_MIX_A = _i32_const(0x9E3779B9)
_MIX_B = _i32_const(0x85EBCA6B)
_MIX_C = _i32_const(0xC2B2AE35)


def _round_up(a: int, b: int) -> int:
    return (a + b - 1) // b * b


def _sublayer_connection_kernel(seed_ref, x_ref, w_ref, b_ref, a2_ref, b2_ref,
                                o_ref, *, dropout_p: float, mm_dtype):
    x = x_ref[...].astype(jnp.float32)                      # (TM, H)
    tm, h = x.shape

    # ---- LayerNorm (BERT_pytorch variant: unbiased std, eps added to std) ----
    mean = jnp.mean(x, axis=-1, keepdims=True)
    diff = x - mean
    var = jnp.sum(diff * diff, axis=-1, keepdims=True) * (1.0 / (h - 1))
    inv_std = 1.0 / (jnp.sqrt(var) + EPS)                   # (TM, 1): per-row, cheap
    normed = diff * inv_std * a2_ref[...] + b2_ref[...]

    # ---- sublayer: dense layer on the MXU (bf16 operands, f32 accumulate) ----
    # TODO(synk): an arbitrary TensorToTensor sublayer cannot be fused
    # generically; it is realized here as a single dense layer.
    y = jnp.dot(normed.astype(mm_dtype), w_ref[...].astype(mm_dtype),
                preferred_element_type=jnp.float32)
    y = y + b_ref[...]

    # ---- dropout (inverted dropout, training semantics) ----
    if dropout_p > 0.0:
        # Stateless counter-based PRNG: murmur3 fmix32 of
        # (seed, global element index), done in int32 with emulated logical
        # shifts so it lowers on Mosaic and in interpret mode alike.
        rows = lax.broadcasted_iota(jnp.int32, (tm, h), 0) + pl.program_id(0) * tm
        cols = lax.broadcasted_iota(jnp.int32, (tm, h), 1)
        v = rows * h + cols + seed_ref[0] * jnp.int32(_MIX_A)
        v = v ^ ((v >> 16) & 0xFFFF)
        v = v * jnp.int32(_MIX_B)
        v = v ^ ((v >> 13) & 0x7FFFF)
        v = v * jnp.int32(_MIX_C)
        v = v ^ ((v >> 16) & 0xFFFF)
        bits31 = (v >> 1) & 0x7FFFFFFF                      # uniform in [0, 2^31)
        thresh = jnp.int32(int(round(dropout_p * (1 << 31))))
        keep = bits31 >= thresh                             # integer-domain test
        y = jnp.where(keep, y * jnp.float32(1.0 / (1.0 - dropout_p)),
                      jnp.float32(0.0))
    # dropout_p == 0.0 (eval mode) -> identity

    # ---- residual ----
    o_ref[...] = (x + y).astype(o_ref.dtype)


def sublayer_connection(x, w, b, a2, b2, *, seed: int, dropout_p: float,
                        row_tile: int = 256, matmul_dtype=jnp.bfloat16):
    """x: [B, S, H]. w: [H, H], b/a2/b2: [H]. Returns [B, S, H] in x.dtype."""
    assert 0.0 <= dropout_p < 1.0
    B, S, H = x.shape
    R = B * S

    # Clamp the row tile to the problem and zero-pad rows so any (B, S) works.
    row_tile = _round_up(max(8, min(row_tile, R)), 8)
    R_pad = _round_up(R, row_tile)

    x2 = x.reshape(R, H)
    if R_pad != R:
        x2 = jnp.pad(x2, ((0, R_pad - R), (0, 0)))

    w_mm = w.astype(matmul_dtype)          # halves the W DMA / VMEM when bf16
    b2d = b.reshape(1, H).astype(jnp.float32)
    a22d = a2.reshape(1, H).astype(jnp.float32)
    b22d = b2.reshape(1, H).astype(jnp.float32)
    seed_arr = jnp.array([seed], dtype=jnp.int32)

    kernel = functools.partial(_sublayer_connection_kernel,
                               dropout_p=float(dropout_p),
                               mm_dtype=matmul_dtype)

    grid_spec = pltpu.PrefetchScalarGridSpec(
        num_scalar_prefetch=1,                                    # seed -> SMEM
        grid=(R_pad // row_tile,),
        in_specs=[
            pl.BlockSpec((row_tile, H), lambda i, seed: (i, 0)),  # x rows
            pl.BlockSpec((H, H), lambda i, seed: (0, 0)),         # W
            pl.BlockSpec((1, H), lambda i, seed: (0, 0)),         # bias
            pl.BlockSpec((1, H), lambda i, seed: (0, 0)),         # a_2
            pl.BlockSpec((1, H), lambda i, seed: (0, 0)),         # b_2
        ],
        out_specs=pl.BlockSpec((row_tile, H), lambda i, seed: (i, 0)),
    )

    # VMEM budget: double-buffered x-in/out tiles + double-buffered W + params,
    # with 2x headroom for kernel intermediates; capped for v7x's 64 MiB VMEM.
    budget = 2 * 2 * row_tile * H * x2.dtype.itemsize
    budget += 2 * H * H * jnp.dtype(matmul_dtype).itemsize
    budget += 4 * 2 * H * 4
    vmem_limit = int(min(max(2 * budget, 32 * 1024 * 1024), 48 * 1024 * 1024))

    out = pl.pallas_call(
        kernel,
        out_shape=jax.ShapeDtypeStruct((R_pad, H), x.dtype),
        grid_spec=grid_spec,
        compiler_params=pltpu.CompilerParams(
            # Row tiles are fully independent -> shard across TensorCores.
            dimension_semantics=("parallel",),
            vmem_limit_bytes=vmem_limit,
        ),
    )(seed_arr, x2, w_mm, b2d, a22d, b22d)

    if R_pad != R:
        out = out[:R]
    return out.reshape(B, S, H)


def _reference_no_dropout(x, w, b, a2, b2):
    """Pure-JAX reference (dropout disabled) matching the torch module."""
    H = x.shape[-1]
    mean = jnp.mean(x, axis=-1, keepdims=True)
    diff = x - mean
    std = jnp.sqrt(jnp.sum(diff * diff, axis=-1, keepdims=True) / (H - 1))
    normed = a2 * diff / (std + EPS) + b2
    y = jnp.einsum("bsh,hk->bsk", normed, w,
                   precision=jax.lax.Precision.HIGHEST) + b
    return x + y


if __name__ == "__main__":
    B, S, H = 2, 8, 32
    key = jax.random.PRNGKey(0)
    kx, kw, kb = jax.random.split(key, 3)

    x = jax.random.normal(kx, (B, S, H), dtype=jnp.float32)
    # Deterministic parameter init (synthetic, not a checkpoint load).
    w = jax.random.normal(kw, (H, H), dtype=jnp.float32) * (1.0 / np.sqrt(H))
    b = jax.random.normal(kb, (H,), dtype=jnp.float32) * 0.01
    a2 = jnp.ones((H,), dtype=jnp.float32)    # LayerNorm gain (init = ones)
    b2 = jnp.zeros((H,), dtype=jnp.float32)   # LayerNorm bias (init = zeros)

    ref = _reference_no_dropout(x, w, b, a2, b2)

    # 1) dropout disabled, f32 matmul -> strict check against the reference.
    out_f32 = sublayer_connection(x, w, b, a2, b2, seed=0, dropout_p=0.0,
                                  matmul_dtype=jnp.float32)
    out_f32 = jax.block_until_ready(out_f32)
    np.testing.assert_allclose(np.asarray(out_f32), np.asarray(ref),
                               rtol=1e-4, atol=1e-4)

    # 2) dropout disabled, bf16 MXU operands (performance default) -> loose check.
    out_bf16 = sublayer_connection(x, w, b, a2, b2, seed=0, dropout_p=0.0)
    out_bf16 = jax.block_until_ready(out_bf16)
    np.testing.assert_allclose(np.asarray(out_bf16), np.asarray(ref),
                               rtol=5e-2, atol=5e-2)

    # 3) row count not a multiple of the tile -> exercises the padding path.
    xr = jax.random.normal(jax.random.PRNGKey(1), (3, 5, H), dtype=jnp.float32)
    out_pad = sublayer_connection(xr, w, b, a2, b2, seed=0, dropout_p=0.0,
                                  matmul_dtype=jnp.float32)
    out_pad = jax.block_until_ready(out_pad)
    np.testing.assert_allclose(
        np.asarray(out_pad),
        np.asarray(_reference_no_dropout(xr, w, b, a2, b2)),
        rtol=1e-4, atol=1e-4)

    # 4) dropout enabled (training semantics, in-kernel hash PRNG).
    out_train = sublayer_connection(x, w, b, a2, b2, seed=1234, dropout_p=0.1)
    out_train = jax.block_until_ready(out_train)
    assert out_train.shape == (B, S, H)
    assert bool(jnp.all(jnp.isfinite(out_train)))
    # Dropped elements collapse to the pure residual (x + 0); some but not all
    # elements should be dropped at p = 0.1.
    n_dropped = int(jnp.sum(out_train == x))
    assert 0 < n_dropped < out_train.size

    print("KERNEL_OK")
</pallas_src>

<mosaic_0001>
module attributes {stable_mosaic.version = 11 : i64} {
  func.func @_sublayer_connection_kernel(%arg0: i32, %arg1: memref<1xi32, #tpu.memory_space<smem>>, %arg2: memref<16x32xf32, #tpu.memory_space<vmem>>, %arg3: memref<32x32xf32, #tpu.memory_space<vmem>>, %arg4: memref<1x32xf32, #tpu.memory_space<vmem>>, %arg5: memref<1x32xf32, #tpu.memory_space<vmem>>, %arg6: memref<1x32xf32, #tpu.memory_space<vmem>>, %arg7: memref<16x32xf32, #tpu.memory_space<vmem>>) attributes {dimension_semantics = [#tpu.dimension_semantics<parallel>], iteration_bounds = array<i64: 1>, scalar_prefetch = 1 : i64, scratch_operands = 0 : i64, tpu.core_type = #tpu.core_type<tc>, window_params = [{transform_indices = @transform_0, window_bounds = array<i64: 16, 32>}, {pipeline_mode = #tpu.pipeline_mode<synchronous>, transform_indices = @transform_1, window_bounds = array<i64: 32, 32>}, {pipeline_mode = #tpu.pipeline_mode<synchronous>, transform_indices = @transform_2, window_bounds = array<i64: 1, 32>}, {pipeline_mode = #tpu.pipeline_mode<synchronous>, transform_indices = @transform_3, window_bounds = array<i64: 1, 32>}, {pipeline_mode = #tpu.pipeline_mode<synchronous>, transform_indices = @transform_4, window_bounds = array<i64: 1, 32>}, {transform_indices = @transform_5, window_bounds = array<i64: 16, 32>}]} {
    %c0 = arith.constant 0 : index
    %c0_0 = arith.constant 0 : index
    %0 = vector.load %arg2[%c0, %c0_0] : memref<16x32xf32, #tpu.memory_space<vmem>>, vector<16x32xf32>
    %cst = arith.constant dense<0.000000e+00> : vector<16xf32>
    %1 = vector.multi_reduction <add>, %0, %cst [1] : vector<16x32xf32> to vector<16xf32>
    %2 = vector.shape_cast %1 : vector<16xf32> to vector<16x1xf32>
    %cst_1 = arith.constant 3.200000e+01 : f32
    %3 = vector.broadcast %cst_1 : f32 to vector<16x1xf32>
    %4 = arith.divf %2, %3 : vector<16x1xf32>
    %5 = vector.broadcast %4 : vector<16x1xf32> to vector<16x32xf32>
    %6 = arith.subf %0, %5 : vector<16x32xf32>
    %7 = arith.mulf %6, %6 : vector<16x32xf32>
    %cst_2 = arith.constant dense<0.000000e+00> : vector<16xf32>
    %8 = vector.multi_reduction <add>, %7, %cst_2 [1] : vector<16x32xf32> to vector<16xf32>
    %9 = vector.shape_cast %8 : vector<16xf32> to vector<16x1xf32>
    %cst_3 = arith.constant 0.0322580636 : f32
    %10 = vector.broadcast %cst_3 : f32 to vector<16x1xf32>
    %11 = arith.mulf %9, %10 : vector<16x1xf32>
    %12 = math.sqrt %11 : vector<16x1xf32>
    %cst_4 = arith.constant 9.99999997E-7 : f32
    %13 = vector.broadcast %cst_4 : f32 to vector<16x1xf32>
    %14 = arith.addf %12, %13 : vector<16x1xf32>
    %cst_5 = arith.constant 1.000000e+00 : f32
    %15 = vector.broadcast %cst_5 : f32 to vector<16x1xf32>
    %16 = arith.divf %15, %14 : vector<16x1xf32>
    %17 = vector.broadcast %16 : vector<16x1xf32> to vector<16x32xf32>
    %18 = arith.mulf %6, %17 : vector<16x32xf32>
    %c0_6 = arith.constant 0 : index
    %c0_7 = arith.constant 0 : index
    %19 = vector.load %arg5[%c0_6, %c0_7] : memref<1x32xf32, #tpu.memory_space<vmem>>, vector<1x32xf32>
    %20 = vector.broadcast %19 : vector<1x32xf32> to vector<16x32xf32>
    %21 = arith.mulf %18, %20 : vector<16x32xf32>
    %c0_8 = arith.constant 0 : index
    %c0_9 = arith.constant 0 : index
    %22 = vector.load %arg6[%c0_8, %c0_9] : memref<1x32xf32, #tpu.memory_space<vmem>>, vector<1x32xf32>
    %23 = vector.broadcast %22 : vector<1x32xf32> to vector<16x32xf32>
    %24 = arith.addf %21, %23 : vector<16x32xf32>
    %c0_10 = arith.constant 0 : index
    %c0_11 = arith.constant 0 : index
    %25 = vector.load %arg3[%c0_10, %c0_11] : memref<32x32xf32, #tpu.memory_space<vmem>>, vector<32x32xf32>
    %cst_12 = arith.constant dense<0.000000e+00> : vector<16x32xf32>
    %26 = tpu.matmul %24, %25, %cst_12 {dimension_numbers = #tpu.dot_dimension_numbers<[1], [0], [0], [1], [0, 0, 1, 1], [], []>} : vector<16x32xf32>, vector<32x32xf32>, vector<16x32xf32> -> vector<16x32xf32>
    %c0_13 = arith.constant 0 : index
    %c0_14 = arith.constant 0 : index
    %27 = vector.load %arg4[%c0_13, %c0_14] : memref<1x32xf32, #tpu.memory_space<vmem>>, vector<1x32xf32>
    %28 = vector.broadcast %27 : vector<1x32xf32> to vector<16x32xf32>
    %29 = arith.addf %26, %28 : vector<16x32xf32>
    %30 = arith.addf %0, %29 : vector<16x32xf32>
    %c0_15 = arith.constant 0 : index
    %c0_16 = arith.constant 0 : index
    %31 = vector.load %arg7[%c0_15, %c0_16] : memref<16x32xf32, #tpu.memory_space<vmem>>, vector<16x32xf32>
    tpu.vector_store %arg7[%c0_15, %c0_16], %30 {strides = array<i32>} : memref<16x32xf32, #tpu.memory_space<vmem>>, vector<16x32xf32>,
    return
  }
  func.func @transform_0(%arg0: i32, %arg1: memref<1xi32, #tpu.memory_space<smem>>) -> (i32, i32) {
    %c0_i32 = arith.constant 0 : i32
    %c0_i32_0 = arith.constant 0 : i32
    return %arg0, %c0_i32 : i32, i32
  }
  func.func @transform_1(%arg0: i32, %arg1: memref<1xi32, #tpu.memory_space<smem>>) -> (i32, i32) {
    %c0_i32 = arith.constant 0 : i32
    %c0_i32_0 = arith.constant 0 : i32
    %c0_i32_1 = arith.constant 0 : i32
    return %c0_i32, %c0_i32_0 : i32, i32
  }
  func.func @transform_2(%arg0: i32, %arg1: memref<1xi32, #tpu.memory_space<smem>>) -> (i32, i32) {
    %c0_i32 = arith.constant 0 : i32
    %c0_i32_0 = arith.constant 0 : i32
    %c0_i32_1 = arith.constant 0 : i32
    return %c0_i32, %c0_i32_0 : i32, i32
  }
  func.func @transform_3(%arg0: i32, %arg1: memref<1xi32, #tpu.memory_space<smem>>) -> (i32, i32) {
    %c0_i32 = arith.constant 0 : i32
    %c0_i32_0 = arith.constant 0 : i32
    %c0_i32_1 = arith.constant 0 : i32
    return %c0_i32, %c0_i32_0 : i32, i32
  }
  func.func @transform_4(%arg0: i32, %arg1: memref<1xi32, #tpu.memory_space<smem>>) -> (i32, i32) {
    %c0_i32 = arith.constant 0 : i32
    %c0_i32_0 = arith.constant 0 : i32
    %c0_i32_1 = arith.constant 0 : i32
    return %c0_i32, %c0_i32_0 : i32, i32
  }
  func.func @transform_5(%arg0: i32, %arg1: memref<1xi32, #tpu.memory_space<smem>>) -> (i32, i32) {
    %c0_i32 = arith.constant 0 : i32
    %c0_i32_0 = arith.constant 0 : i32
    return %arg0, %c0_i32 : i32, i32
  }
}

</mosaic_0001>

<llo_original>
// kernel: tpu_custom_call.1
$region0: #{tpu_custom_call.1}
  #allocation0 [shape = 'u32[]', space=smem, size = 0x4, offset = 0x4, fixed_abs, tag = 'smem constant byte address 0x4 - core index']
  #allocation1 [shape = 'u32[144,128]{1,0:T(1,128)}', space=vmem, size = 0x12000, scoped, tag = 'internal scratch']
  #allocation2 [shape = 's32[1]{0}', space=sflag, size = 0x4, scoped, tag = 'scoped memory for tpu_custom_call.1']
  #allocation3 [shape = 's32[1]{0:T(128)S(6)}', space=smem, size = 0x200, scoped, tag = 'prefetched SMEM operand 0']
  %s0 = inlined_call_operand.<no memory space> [shape: s32[1], index: 0, kind: input, shape index: {}]
  %s1 = inlined_call_operand.hbm [shape: f32[16,32], index: 1, kind: input, shape index: {}]
  %s2 = inlined_call_operand.hbm [shape: f32[32,32], index: 2, kind: input, shape index: {}]
  %s3 = inlined_call_operand.vmem [shape: f32[1,32], index: 3, kind: input, shape index: {}]
  %s4 = inlined_call_operand.vmem [shape: f32[1,32], index: 4, kind: input, shape index: {}]
  %s5 = inlined_call_operand.vmem [shape: f32[1,32], index: 5, kind: input, shape index: {}]
  %s6 = inlined_call_operand.hbm [shape: f32[16,32], index: 6, kind: output, shape index: {}]
  %s7 = sld [smem:[#allocation0]]
  $region38: #{tpu_custom_call.1} parent=0
    _
  %s9 = ssub.s32 1, %s7
  %s10 = scalar_select 0, %s9, %s7
  %11 = sst [smem:[#allocation3]] %s0
  $region1: #{tpu_custom_call.1} parent=0
    #allocation4 [shape = 'u8[8192]{0}', space=vmem, size = 0x2000, scoped, tag = 'input window, operand 1, single buffered']
    #allocation5 [shape = 's32[1]{0}', space=sflag, size = 0x4, scoped, tag = 'scoped memory for tpu_custom_call.1']
    #allocation6 [shape = 's32[1]{0}', space=sflag, size = 0x4, scoped, tag = 'scoped memory for tpu_custom_call.1']
    #allocation7 [shape = 'u8[16384]{0}', space=vmem, size = 0x4000, scoped, tag = 'input window, operand 2, single buffered']
    #allocation8 [shape = 's32[1]{0}', space=sflag, size = 0x4, scoped, tag = 'scoped memory for tpu_custom_call.1']
    #allocation9 [shape = 'u8[8192]{0}', space=vmem, size = 0x2000, scoped, tag = 'output window, operand 0, single buffered']
    %12 = vsyncpa [#allocation5], 0
    %13 = vsyncpa [#allocation8], 0
    %14 = vsyncpa [#allocation6], 0
    // Predicated region
    $region2: #{tpu_custom_call.1} parent=1 // pred_check
      _
    $region3: #{tpu_custom_call.1} parent=1 // pred_check_branch
      %16 = sbr.rel (0) target = $region5
    $region4: #{tpu_custom_call.1} parent=1 // pred_region
      %s18 = ssub.s32 256, 256
      %19 = vsyncadd [#allocation5], %s18
      %s20 = sshll.u32 [#allocation4], 4
      %s21 = int_to_ptr.vmem [resolvable:$true] %s20
      %26 = dma.hbm_to_vmem [thread:$0]  %s1, 256, %s21, [#allocation5], 128, 128, 8
    $region5: #{tpu_custom_call.1} parent=1 // pred_fallthru
      _
    // Predicated region
    $region6: #{tpu_custom_call.1} parent=1 // pred_check
      _
    $region7: #{tpu_custom_call.1} parent=1 // pred_check_branch
      %28 = sbr.rel (0) target = $region9
    $region8: #{tpu_custom_call.1} parent=1 // pred_region
      %s30 = ssub.s32 512, 512
      %31 = vsyncadd [#allocation8], %s30
      %s32 = sshll.u32 [#allocation7], 4
      %s33 = int_to_ptr.vmem [resolvable:$true] %s32
      %38 = dma.hbm_to_vmem [thread:$0]  %s2, 512, %s33, [#allocation8], 128, 128, 8
    $region9: #{tpu_custom_call.1} parent=1 // pred_fallthru
      _
    // Predicated region
    $region10: #{tpu_custom_call.1} parent=1 // pred_check
      _
    $region11: #{tpu_custom_call.1} parent=1 // pred_check_branch
      %40 = sbr.rel (0) target = $region13
    $region12: #{tpu_custom_call.1} parent=1 // pred_region
      _
    $region13: #{tpu_custom_call.1} parent=1 // pred_fallthru
      _
    // Predicated region
    $region14: #{tpu_custom_call.1} parent=1 // pred_check
      _
    $region15: #{tpu_custom_call.1} parent=1 // pred_check_branch
      %42 = sbr.rel (0) target = $region17
    $region16: #{tpu_custom_call.1} parent=1 // pred_region
      _
    $region17: #{tpu_custom_call.1} parent=1 // pred_fallthru
      _
    // Predicated region
    $region18: #{tpu_custom_call.1} parent=1 // pred_check
      _
    $region19: #{tpu_custom_call.1} parent=1 // pred_check_branch
      %44 = sbr.rel (0) target = $region21
    $region20: #{tpu_custom_call.1} parent=1 // pred_region
      _
    $region21: #{tpu_custom_call.1} parent=1 // pred_fallthru
      _
    // Predicated region
    $region22: #{tpu_custom_call.1} parent=1 // pred_check
      _
    $region23: #{tpu_custom_call.1} parent=1 // pred_check_branch
      %46 = sbr.rel (0) target = $region25
    $region24: #{tpu_custom_call.1} parent=1 // pred_region
      %47 = dma.done [#allocation5], 256
    $region25: #{tpu_custom_call.1} parent=1 // pred_fallthru
      _
    // Predicated region
    $region26: #{tpu_custom_call.1} parent=1 // pred_check
      _
    $region27: #{tpu_custom_call.1} parent=1 // pred_check_branch
      %49 = sbr.rel (0) target = $region29
    $region28: #{tpu_custom_call.1} parent=1 // pred_region
      %50 = dma.done [#allocation8], 512
    $region29: #{tpu_custom_call.1} parent=1 // pred_fallthru
      _
    %v51 = vld [vmem:[#allocation4] sm:$0xff]
    %v52 = vld [vmem:[#allocation4 + $0x8] sm:$0xff]
    %vm53 = vcmask 261120
    %v54 = vsel %vm53, %v51, 0.0
    %55 = vadd.xlane.f32.xlu0 %v54
    %v56 = vpop.xlane.xlu0 %55
    %v57 = vsel %vm53, %v52, 0.0
    %58 = vadd.xlane.f32.xlu0 %v57
    %v59 = vpop.xlane.xlu0 %58
    %v60 = vrcp.pop 32.0
    %v61 = vmul.f32 %v56, %v60
    %v62 = vmul.f32 %v59, %v60
    %v63 = vsub.f32 %v51, %v61
    %v64 = vsub.f32 %v52, %v62
    %v65 = vmul.f32 %v63, %v63
    %v66 = vmul.f32 %v64, %v64
    %v67 = vsel %vm53, %v65, 0.0
    %68 = vadd.xlane.f32.xlu0 %v67
    %v69 = vpop.xlane.xlu0 %68
    %v70 = vsel %vm53, %v66, 0.0
    %71 = vadd.xlane.f32.xlu0 %v70
    %v72 = vpop.xlane.xlu0 %71
    %v73 = vmul.f32 %v69, 0.032258064
    %v74 = vmul.f32 %v72, 0.032258064
    %v75 = vrsqrt.pop %v73
    %v76 = vmul.f32 %v73, %v75
    %vm77 = vcmp.eq.f32.partialorder %v73, inf
    %v78 = vsel %vm77, %v73, %v76
    %vm79 = vcmp.eq.f32.partialorder %v73, 0.0
    %v80 = vand.u32 %v73, 2147483648
    %v81 = vsel %vm79, %v80, %v78
    %v82 = vrsqrt.pop %v74
    %v83 = vmul.f32 %v74, %v82
    %vm84 = vcmp.eq.f32.partialorder %v74, inf
    %v85 = vsel %vm84, %v74, %v83
    %vm86 = vcmp.eq.f32.partialorder %v74, 0.0
    %v87 = vand.u32 %v74, 2147483648
    %v88 = vsel %vm86, %v87, %v85
    %v89 = vadd.f32 %v81, 1e-06
    %v90 = vadd.f32 %v88, 1e-06
    %v91 = vrcp.pop %v89
    %v92 = vmul.f32 1.0, %v91
    %v93 = vrcp.pop %v90
    %v94 = vmul.f32 1.0, %v93
    %v95 = vmul.f32 %v63, %v92
    %v96 = vmul.f32 %v64, %v94
    %v97 = vld [vmem:[%s4] sm:$0x1]
    %v99 = vlaneseq
    %v100 = vshrl.u32 %v99, 7
    %v101 = vsub.s32 0, %v100
    %v102 = vrot.slane %v97, %v101
    %v104 = vmul.f32 %v95, %v102
    %v105 = vmul.f32 %v96, %v102
    %v106 = vld [vmem:[%s5] sm:$0x1]
    %v108 = vlaneseq
    %v109 = vshrl.u32 %v108, 7
    %v110 = vsub.s32 0, %v109
    %v111 = vrot.slane %v106, %v110
    %v113 = vadd.f32 %v104, %v111
    %v114 = vadd.f32 %v105, %v111
    %v115 = vld [vmem:[#allocation7] sm:$0xff]
    %v116 = vld [vmem:[#allocation7 + $0x8] sm:$0xff]
    %v117 = vld [vmem:[#allocation7 + $0x10] sm:$0xff]
    %v118 = vld [vmem:[#allocation7 + $0x18] sm:$0xff]
    %v119 = vld [vmem:[%s3] sm:$0x1]
    %v121 = vlaneseq
    %v122 = vshrl.u32 %v121, 7
    %v123 = vsub.s32 0, %v122
    %v124 = vrot.slane %v119, %v123
    %v127 = vsel %vm53, %v113, 0
    %v130 = vsel %vm53, %v114, 0
    %132 = vmatprep.subr.mxu0 0.0
    %133 = vmatpush1.msra.mxu0 %v115
    %134 = vmatprep.subr.mxu0 0.0
    %135 = vmatpush1.msra.mxu0 %v116
    %136 = vmatprep.subr.mxu0 0.0
    %137 = vmatpush1.msra.mxu0 %v117
    %138 = vmatprep.subr.mxu0 0.0
    %139 = vmatpush1.msra.mxu0 %v118
    %140 = vmatprep.subr.mxu0 0.0
    %141 = vmatpush1.msra.mxu0 0.0
    %142 = vmatprep.subr.mxu0 0.0
    %143 = vmatpush1.msra.mxu0 0.0
    %144 = vmatprep.subr.mxu0 0.0
    %145 = vmatpush1.msra.mxu0 0.0
    %146 = vmatprep.subr.mxu0 0.0
    %147 = vmatpush1.msra.mxu0 0.0
    %148 = vmatprep.subr.mxu0 0.0
    %149 = vmatpush1.msra.mxu0 0.0
    %150 = vmatprep.subr.mxu0 0.0
    %151 = vmatpush1.msra.mxu0 0.0
    %152 = vmatprep.subr.mxu0 0.0
    %153 = vmatpush1.msra.mxu0 0.0
    %154 = vmatprep.subr.mxu0 0.0
    %155 = vmatpush1.msra.mxu0 0.0
    %156 = vmatprep.subr.mxu0 0.0
    %157 = vmatpush1.msra.mxu0 0.0
    %158 = vmatprep.subr.mxu0 0.0
    %159 = vmatpush1.msra.mxu0 0.0
    %160 = vmatprep.subr.mxu0 0.0
    %161 = vmatpush1.msra.mxu0 0.0
    %162 = vmatprep.subr.mxu0 0.0
    %163 = vmatpush1.msra.mxu0 0.0
    %164 = vmatprep.subr.mxu0 0.0
    %165 = vmatpush1.msra.mxu0 0.0
    %166 = vmatprep.subr.mxu0 0.0
    %167 = vmatpush1.msra.mxu0 0.0
    %168 = vmatprep.subr.mxu0 0.0
    %169 = vmatpush1.msra.mxu0 0.0
    %170 = vmatprep.subr.mxu0 0.0
    %171 = vmatpush1.msra.mxu0 0.0
    %172 = vmatprep.subr.mxu0 0.0
    %173 = vmatpush1.msra.mxu0 0.0
    %174 = vmatprep.subr.mxu0 0.0
    %175 = vmatpush1.msra.mxu0 0.0
    %176 = vmatprep.subr.mxu0 0.0
    %177 = vmatpush1.msra.mxu0 0.0
    %178 = vmatprep.subr.mxu0 0.0
    %179 = vmatpush1.msra.mxu0 0.0
    %180 = vmatprep.subr.mxu0 0.0
    %181 = vmatpush1.msra.mxu0 0.0
    %182 = vmatprep.subr.mxu0 0.0
    %183 = vmatpush1.msra.mxu0 0.0
    %184 = vmatprep.subr.mxu0 0.0
    %185 = vmatpush1.msra.mxu0 0.0
    %186 = vmatprep.subr.mxu0 0.0
    %187 = vmatpush1.msra.mxu0 0.0
    %188 = vmatprep.subr.mxu0 0.0
    %189 = vmatpush1.msra.mxu0 0.0
    %190 = vmatprep.subr.mxu0 0.0
    %191 = vmatpush1.msra.mxu0 0.0
    %192 = vmatprep.subr.mxu0 0.0
    %193 = vmatpush1.msra.mxu0 0.0
    %194 = vmatprep.subr.mxu0 0.0
    %195 = vmatpush1.msra.mxu0 0.0
    %196 = vmatprep.mubr.f32.mxu0 0.0
    %197 = vmatmul.mubr.f32.gmra.mrb[0].mxu0 %v127
    %v198 = vpop.f32.mrb[0].mxu0
    %v199 = vadd.f32 %v124, %v198
    %v200 = vpop.f32.mrb[0].mxu0
    %201 = vmatprep.mubr.f32.mxu0 0.0
    %202 = vmatmul.mubr.f32.gmra.mrb[0].mxu0 %v130
    %v203 = vpop.f32.mrb[0].mxu0
    %v204 = vadd.f32 %v124, %v203
    %v205 = vpop.f32.mrb[0].mxu0
    %206 = vdwg.mxu0
    %v207 = vadd.f32 %v51, %v199
    %v208 = vadd.f32 %v52, %v204
    %209 = vst.msk [vmem:[#allocation9] sm:$0xff] %vm53, %v207
    %210 = vst.msk [vmem:[#allocation9 + $0x8] sm:$0xff] %vm53, %v208
    // Predicated region
    $region30: #{tpu_custom_call.1} parent=1 // pred_check
      _
    $region31: #{tpu_custom_call.1} parent=1 // pred_check_branch
      %212 = sbr.rel (0) target = $region33
    $region32: #{tpu_custom_call.1} parent=1 // pred_region
      %s214 = ssub.s32 256, 256
      %215 = vsyncadd [#allocation6], %s214
      %s216 = sshll.u32 [#allocation9], 4
      %s217 = int_to_ptr.vmem [resolvable:$true] %s216
      %222 = dma.vmem_to_hbm [thread:$0]  %s217, 256, %s6, [#allocation6], 128, 128, 8
    $region33: #{tpu_custom_call.1} parent=1 // pred_fallthru
      _
    // Predicated region
    $region34: #{tpu_custom_call.1} parent=1 // pred_check
      _
    $region35: #{tpu_custom_call.1} parent=1 // pred_check_branch
      %224 = sbr.rel (0) target = $region37
    $region36: #{tpu_custom_call.1} parent=1 // pred_region
      %225 = dma.done [#allocation6], 256
    $region37: #{tpu_custom_call.1} parent=1 // pred_fallthru
      _
    %226 = vsyncpa [#allocation5], 1
    %227 = vsyncpa [#allocation8], 1
    %228 = vsyncpa [#allocation6], 1

</llo_original>
